<compile_context>
chip_gen: v5e
topology: v5e:2x2
jax: 0.10.0
libtpu: 0.0.40
codegen_flags: <defaults>
</compile_context>

<pallas_src>
import functools

import jax
import jax.numpy as jnp
from jax.experimental import pallas as pl
from jax.experimental.pallas import tpu as pltpu

LANES = 128
DEFAULT_BLOCK_ROWS = 2048      # 1 MiB / f32 input tile; 4 MiB double-buffered working set
DEFAULT_NUM_PARALLEL = 1       # v5e/v6e: single TensorCore.  Pass 2 on v7x (megacore).


def _partial_sums_kernel(p_ref, t_ref, o_ref,
                         acc_st, acc_s, acc_t, acc_b,
                         *, n_valid, block_rows, j_tiles, nblocks, n_full_tiles):
    """Accumulate the 4 global sums needed by the combined loss.

    Grid is (num_parallel, j_tiles): the leading axis is 'parallel' (each slice owns a
    disjoint range of row tiles and its own output slab), the trailing axis is the
    sequential reduction over that slice's tiles.

    o_ref layout per parallel slice (rows of 8-sublane, 128-lane partial sums):
        [ 0: 8)  -> sum(sigmoid(x) * t)
        [ 8:16)  -> sum(sigmoid(x))
        [16:24)  -> sum(t)
        [24:32)  -> sum(bce_with_logits(x, t))
    """
    c = pl.program_id(0)
    j = pl.program_id(1)
    tile = c * j_tiles + j                      # logical (unclamped) tile id

    @pl.when(j == 0)
    def _init():
        acc_st[...] = jnp.zeros_like(acc_st)
        acc_s[...] = jnp.zeros_like(acc_s)
        acc_t[...] = jnp.zeros_like(acc_t)
        acc_b[...] = jnp.zeros_like(acc_b)

    def _reduce(v):
        # (br, 128) -> (8, 128) in-register tree sum.  The reshape groups whole
        # (8, 128) vregs (tile-aligned), so it is free; the sum is pure VALU adds
        # with no per-vreg accumulator loads/stores.
        return jnp.sum(v.reshape(block_rows // 8, 8, LANES), axis=0)

    def _accumulate(x, t, maskf):
        # One exp per element, shared between sigmoid and the BCE log term:
        #   e = exp(-|x|)
        #   sigmoid(x) = where(x >= 0, 1, e) / (1 + e)
        #   bce(x, t)  = max(x, 0) - x*t + log1p(e)      (PyTorch's stable form)
        e = jnp.exp(-jnp.abs(x))
        inv = pl.reciprocal(1.0 + e)            # exact, preserves 1e-5 match
        sig = jnp.where(x >= 0.0, 1.0, e) * inv
        bce = jnp.maximum(x, 0.0) - x * t + jnp.log1p(e)
        if maskf is not None:
            sig = sig * maskf
            bce = bce * maskf
        acc_st[...] += _reduce(sig * t)
        acc_s[...] += _reduce(sig)
        acc_t[...] += _reduce(t)
        acc_b[...] += _reduce(bce)

    interior = tile < n_full_tiles              # trace-time constant RHS, scalar compare

    @pl.when(interior)
    def _fast():
        # Fully-valid tile: no iota, no selects, no mask multiplies.
        _accumulate(p_ref[...].astype(jnp.float32),
                    t_ref[...].astype(jnp.float32), None)

    @pl.when(jnp.logical_not(interior))
    def _boundary():
        # Last partial tile and clamped overshoot tiles: build the validity mask from
        # the per-tile remaining count.  The product uses the *clamped* tile id, so it
        # stays < n_valid < 2**31; overshoot tiles are killed by the (tile < nblocks)
        # scalar gate instead of an (overflow-prone) unclamped index.
        x = p_ref[...].astype(jnp.float32)
        t = t_ref[...].astype(jnp.float32)
        tile_elems = block_rows * LANES
        rem = n_valid - jnp.minimum(tile, nblocks - 1) * tile_elems
        r = jax.lax.broadcasted_iota(jnp.int32, x.shape, 0)
        l = jax.lax.broadcasted_iota(jnp.int32, x.shape, 1)
        valid = ((r * LANES + l) < rem) & (tile < nblocks)
        maskf = valid.astype(jnp.float32)
        # Zero the inputs where invalid *before* the transcendentals so unspecified
        # padding / out-of-bounds bytes (possibly NaN/Inf) cannot poison the sums.
        x = jnp.where(valid, x, 0.0)
        t = jnp.where(valid, t, 0.0)
        _accumulate(x, t, maskf)

    @pl.when(j == j_tiles - 1)
    def _finalize():
        o_ref[0:8, :] = acc_st[...]
        o_ref[8:16, :] = acc_s[...]
        o_ref[16:24, :] = acc_t[...]
        o_ref[24:32, :] = acc_b[...]


def adaptive_combined_loss(predict, target,
                           dice_weight=0.6, bce_weight=0.4, smooth=1.0,
                           block_rows=DEFAULT_BLOCK_ROWS,
                           num_parallel=DEFAULT_NUM_PARALLEL):
    """JAX/Pallas equivalent of AdaptiveCombinedLoss.forward.

    predict / target keep their input dtype into the kernel (bf16 inputs move half the
    HBM bytes; a binary target may also be cast to bf16/int8 by the caller — it is
    upcast to f32 inside).  All math is f32 in-kernel; the scalar epilogue (dice ratio,
    BCE mean, adaptive weighting) is plain JAX so weight/smooth changes never recompile.
    """
    n = int(predict.size)
    assert int(target.size) == n
    assert 0 < n < 2**31 - 2048, "in-kernel index math is int32"
    assert block_rows % 8 == 0

    p = predict.reshape(-1)
    t = target.reshape(-1)

    # Pack into a lane-major (rows, 128) slab, padded to a whole number of (8, 128)
    # vregs so the in-kernel tree reduce regroups whole vregs.  The <=1023-element pad
    # is zeroed by the boundary-tile mask.
    pad = (-n) % (8 * LANES)
    if pad:
        p = jnp.pad(p, (0, pad))
        t = jnp.pad(t, (0, pad))
    rows = (n + pad) // LANES
    p2 = p.reshape(rows, LANES)
    t2 = t.reshape(rows, LANES)

    br = min(block_rows, rows)                 # multiple of 8 (rows is a multiple of 8)
    nblocks = pl.cdiv(rows, br)
    num_parallel = max(1, min(num_parallel, nblocks))   # never more slices than tiles
    j_tiles = pl.cdiv(nblocks, num_parallel)
    n_full_tiles = n // (br * LANES)           # tiles strictly below this are fully valid

    def in_map(c, j):
        # Clamp so overshoot tiles (nblocks % num_parallel != 0) stay in bounds; their
        # contribution is zeroed by the in-kernel mask.
        return (jnp.minimum(c * j_tiles + j, nblocks - 1), 0)

    tile_spec = pl.BlockSpec((br, LANES), in_map)

    kernel = functools.partial(
        _partial_sums_kernel, n_valid=n, block_rows=br, j_tiles=j_tiles,
        nblocks=nblocks, n_full_tiles=n_full_tiles)

    # VMEM budget at defaults (br=2048, f32): 2 inputs x 2 buffers x 1 MiB + 16 KiB
    # scratch ≈ 4 MiB — fits the default scoped VMEM on v5e (16 MiB) and v6e/v7x (32 MiB).
    # TODO(synk): on v7x, verify both TensorCores pick up the size-2 "parallel" slices;
    # if not, switch the leading axis to pltpu.CORE_PARALLEL.
    partials = pl.pallas_call(
        kernel,
        out_shape=jax.ShapeDtypeStruct((num_parallel, 4 * 8, LANES), jnp.float32),
        grid_spec=pltpu.PrefetchScalarGridSpec(
            num_scalar_prefetch=0,
            grid=(num_parallel, j_tiles),
            in_specs=[tile_spec, tile_spec],
            out_specs=pl.BlockSpec((None, 4 * 8, LANES), lambda c, j: (c, 0, 0)),
            scratch_shapes=[pltpu.VMEM((8, LANES), jnp.float32)] * 4,
        ),
        compiler_params=pltpu.CompilerParams(
            dimension_semantics=("parallel", "arbitrary")),
    )(p2, t2)

    sums = jnp.sum(partials.reshape(num_parallel, 4, 8, LANES), axis=(0, 2, 3))
    inter, psum, tsum, bsum = sums[0], sums[1], sums[2], sums[3]

    dice = (2.0 * inter + smooth) / (psum + tsum + smooth)
    dice_loss = 1.0 - dice
    bce_loss = bsum / jnp.float32(n)
    # TODO(synk): update_weights(epoch) scheduling is host-side bookkeeping in the
    # PyTorch module; the caller passes the current weights here.
    return dice_weight * dice_loss + bce_weight * bce_loss


def _reference_loss(predict, target, dice_weight=0.6, bce_weight=0.4, smooth=1.0):
    """Pure-JAX reference mirroring the PyTorch module exactly."""
    x = predict.reshape(-1).astype(jnp.float32)
    t = target.reshape(-1).astype(jnp.float32)
    p = jax.nn.sigmoid(x)
    inter = jnp.sum(p * t)
    dice = (2.0 * inter + smooth) / (jnp.sum(p) + jnp.sum(t) + smooth)
    dice_loss = 1.0 - dice
    bce = jnp.maximum(x, 0.0) - x * t + jnp.log1p(jnp.exp(-jnp.abs(x)))
    bce_loss = jnp.mean(bce)
    return dice_weight * dice_loss + bce_weight * bce_loss


if __name__ == "__main__":
    key = jax.random.PRNGKey(0)
    k1, k2, k3, k4, k5, k6 = jax.random.split(key, 6)

    # Segmentation-style logits [N, 1, H, W] with a binary target (small shapes).
    predict = jax.random.normal(k1, (2, 1, 16, 16), dtype=jnp.float32)
    target = (jax.random.uniform(k2, (2, 1, 16, 16)) > 0.5).astype(jnp.float32)
    loss = jax.block_until_ready(adaptive_combined_loss(predict, target))
    ref = _reference_loss(predict, target)
    assert jnp.allclose(loss, ref, rtol=1e-5, atol=1e-5), (loss, ref)

    # Ragged size (not a multiple of 1024) exercises the boundary-mask path.
    p_odd = jax.random.normal(k3, (3, 1, 7, 11), dtype=jnp.float32)
    t_odd = (jax.random.uniform(k4, (3, 1, 7, 11)) > 0.5).astype(jnp.float32)
    loss_odd = jax.block_until_ready(adaptive_combined_loss(p_odd, t_odd))
    ref_odd = _reference_loss(p_odd, t_odd)
    assert jnp.allclose(loss_odd, ref_odd, rtol=1e-5, atol=1e-5), (loss_odd, ref_odd)

    # Multi-tile case: small block_rows forces interior fast-path tiles, one partial
    # boundary tile, and (num_parallel=2) one clamped overshoot tile.
    p_big = jax.random.normal(k5, (4, 1, 64, 80), dtype=jnp.float32)
    t_big = (jax.random.uniform(k6, (4, 1, 64, 80)) > 0.5).astype(jnp.float32)
    loss_big = jax.block_until_ready(
        adaptive_combined_loss(p_big, t_big, block_rows=64, num_parallel=2))
    ref_big = _reference_loss(p_big, t_big)
    assert jnp.allclose(loss_big, ref_big, rtol=1e-5, atol=1e-5), (loss_big, ref_big)

    # bf16 passthrough (dtype preserved into the kernel, upcast to f32 inside).
    loss_bf16 = jax.block_until_ready(
        adaptive_combined_loss(predict.astype(jnp.bfloat16),
                               target.astype(jnp.bfloat16)))
    ref_bf16 = _reference_loss(predict.astype(jnp.bfloat16).astype(jnp.float32),
                               target.astype(jnp.bfloat16).astype(jnp.float32))
    assert jnp.allclose(loss_bf16, ref_bf16, rtol=1e-5, atol=1e-5), (loss_bf16, ref_bf16)

    print("KERNEL_OK")
</pallas_src>

<mosaic_0001>
module attributes {stable_mosaic.version = 11 : i64} {
  func.func @_partial_sums_kernel(%arg0: i32, %arg1: i32, %arg2: memref<8x128xf32, #tpu.memory_space<vmem>>, %arg3: memref<8x128xf32, #tpu.memory_space<vmem>>, %arg4: memref<1x32x128xf32, #tpu.memory_space<vmem>>, %arg5: memref<8x128xf32, #tpu.memory_space<vmem>>, %arg6: memref<8x128xf32, #tpu.memory_space<vmem>>, %arg7: memref<8x128xf32, #tpu.memory_space<vmem>>, %arg8: memref<8x128xf32, #tpu.memory_space<vmem>>) attributes {dimension_semantics = [#tpu.dimension_semantics<parallel>, #tpu.dimension_semantics<arbitrary>], iteration_bounds = array<i64: 1, 1>, scalar_prefetch = 0 : i64, scratch_operands = 4 : i64, tpu.core_type = #tpu.core_type<tc>, window_params = [{transform_indices = @transform_0, window_bounds = array<i64: 8, 128>}, {transform_indices = @transform_1, window_bounds = array<i64: 8, 128>}, {transform_indices = @transform_2, window_bounds = array<i64: 1, 32, 128>}]} {
    %c1_i32 = arith.constant 1 : i32
    %0 = arith.muli %arg0, %c1_i32 : i32
    %1 = arith.addi %0, %arg1 : i32
    %c0_i32 = arith.constant 0 : i32
    %2 = arith.cmpi eq, %arg1, %c0_i32 : i32
    %3 = arith.extui %2 : i1 to i32
    %c0_i32_0 = arith.constant 0 : i32
    %4 = arith.cmpi ne, %3, %c0_i32_0 : i32
    scf.if %4 {
      %cst = arith.constant 0.000000e+00 : f32
      %14 = vector.broadcast %cst : f32 to vector<8x128xf32>
      %c0 = arith.constant 0 : index
      %c0_6 = arith.constant 0 : index
      %15 = vector.load %arg5[%c0, %c0_6] : memref<8x128xf32, #tpu.memory_space<vmem>>, vector<8x128xf32>
      tpu.vector_store %arg5[%c0, %c0_6], %14 {strides = array<i32>} : memref<8x128xf32, #tpu.memory_space<vmem>>, vector<8x128xf32>,
      %cst_7 = arith.constant 0.000000e+00 : f32
      %16 = vector.broadcast %cst_7 : f32 to vector<8x128xf32>
      %c0_8 = arith.constant 0 : index
      %c0_9 = arith.constant 0 : index
      %17 = vector.load %arg6[%c0_8, %c0_9] : memref<8x128xf32, #tpu.memory_space<vmem>>, vector<8x128xf32>
      tpu.vector_store %arg6[%c0_8, %c0_9], %16 {strides = array<i32>} : memref<8x128xf32, #tpu.memory_space<vmem>>, vector<8x128xf32>,
      %cst_10 = arith.constant 0.000000e+00 : f32
      %18 = vector.broadcast %cst_10 : f32 to vector<8x128xf32>
      %c0_11 = arith.constant 0 : index
      %c0_12 = arith.constant 0 : index
      %19 = vector.load %arg7[%c0_11, %c0_12] : memref<8x128xf32, #tpu.memory_space<vmem>>, vector<8x128xf32>
      tpu.vector_store %arg7[%c0_11, %c0_12], %18 {strides = array<i32>} : memref<8x128xf32, #tpu.memory_space<vmem>>, vector<8x128xf32>,
      %cst_13 = arith.constant 0.000000e+00 : f32
      %20 = vector.broadcast %cst_13 : f32 to vector<8x128xf32>
      %c0_14 = arith.constant 0 : index
      %c0_15 = arith.constant 0 : index
      %21 = vector.load %arg8[%c0_14, %c0_15] : memref<8x128xf32, #tpu.memory_space<vmem>>, vector<8x128xf32>
      tpu.vector_store %arg8[%c0_14, %c0_15], %20 {strides = array<i32>} : memref<8x128xf32, #tpu.memory_space<vmem>>, vector<8x128xf32>,
    } else {
    }
    %c0_i32_1 = arith.constant 0 : i32
    %5 = arith.cmpi slt, %1, %c0_i32_1 : i32
    %6 = arith.extui %5 : i1 to i32
    %c0_i32_2 = arith.constant 0 : i32
    %7 = arith.cmpi ne, %6, %c0_i32_2 : i32
    scf.if %7 {
      %c0 = arith.constant 0 : index
      %c0_6 = arith.constant 0 : index
      %14 = vector.load %arg2[%c0, %c0_6] : memref<8x128xf32, #tpu.memory_space<vmem>>, vector<8x128xf32>
      %c0_7 = arith.constant 0 : index
      %c0_8 = arith.constant 0 : index
      %15 = vector.load %arg3[%c0_7, %c0_8] : memref<8x128xf32, #tpu.memory_space<vmem>>, vector<8x128xf32>
      %16 = math.absf %14 : vector<8x128xf32>
      %cst = arith.constant 0.000000e+00 : f32
      %17 = vector.broadcast %cst : f32 to vector<8x128xf32>
      %18 = arith.subf %17, %16 : vector<8x128xf32>
      %19 = math.exp %18 : vector<8x128xf32>
      %cst_9 = arith.constant 1.000000e+00 : f32
      %20 = vector.broadcast %cst_9 : f32 to vector<8x128xf32>
      %21 = arith.addf %20, %19 : vector<8x128xf32>
      %22 = tpu.reciprocal %21 : vector<8x128xf32> -> vector<8x128xf32>
      %cst_10 = arith.constant 0.000000e+00 : f32
      %23 = vector.broadcast %cst_10 : f32 to vector<8x128xf32>
      %24 = arith.cmpf oge, %14, %23 : vector<8x128xf32>
      %cst_11 = arith.constant 1.000000e+00 : f32
      %25 = vector.broadcast %cst_11 : f32 to vector<8x128xf32>
      %26 = arith.select %24, %25, %19 : vector<8x128xi1>, vector<8x128xf32>
      %27 = arith.mulf %26, %22 : vector<8x128xf32>
      %cst_12 = arith.constant 0.000000e+00 : f32
      %28 = vector.broadcast %cst_12 : f32 to vector<8x128xf32>
      %29 = arith.maximumf %14, %28 : vector<8x128xf32>
      %30 = arith.mulf %14, %15 : vector<8x128xf32>
      %31 = arith.subf %29, %30 : vector<8x128xf32>
      %32 = math.log1p %19 : vector<8x128xf32>
      %33 = arith.addf %31, %32 : vector<8x128xf32>
      %c0_13 = arith.constant 0 : index
      %c0_14 = arith.constant 0 : index
      %34 = vector.load %arg5[%c0_13, %c0_14] : memref<8x128xf32, #tpu.memory_space<vmem>>, vector<8x128xf32>
      %35 = arith.mulf %27, %15 : vector<8x128xf32>
      %36 = vector.shape_cast %35 : vector<8x128xf32> to vector<1x8x128xf32>
      %cst_15 = arith.constant dense<0.000000e+00> : vector<8x128xf32>
      %37 = vector.multi_reduction <add>, %36, %cst_15 [0] : vector<1x8x128xf32> to vector<8x128xf32>
      %38 = arith.addf %34, %37 : vector<8x128xf32>
      %c0_16 = arith.constant 0 : index
      %c0_17 = arith.constant 0 : index
      %39 = vector.load %arg5[%c0_16, %c0_17] : memref<8x128xf32, #tpu.memory_space<vmem>>, vector<8x128xf32>
      tpu.vector_store %arg5[%c0_16, %c0_17], %38 {strides = array<i32>} : memref<8x128xf32, #tpu.memory_space<vmem>>, vector<8x128xf32>,
      %c0_18 = arith.constant 0 : index
      %c0_19 = arith.constant 0 : index
      %40 = vector.load %arg6[%c0_18, %c0_19] : memref<8x128xf32, #tpu.memory_space<vmem>>, vector<8x128xf32>
      %41 = vector.shape_cast %27 : vector<8x128xf32> to vector<1x8x128xf32>
      %cst_20 = arith.constant dense<0.000000e+00> : vector<8x128xf32>
      %42 = vector.multi_reduction <add>, %41, %cst_20 [0] : vector<1x8x128xf32> to vector<8x128xf32>
      %43 = arith.addf %40, %42 : vector<8x128xf32>
      %c0_21 = arith.constant 0 : index
      %c0_22 = arith.constant 0 : index
      %44 = vector.load %arg6[%c0_21, %c0_22] : memref<8x128xf32, #tpu.memory_space<vmem>>, vector<8x128xf32>
      tpu.vector_store %arg6[%c0_21, %c0_22], %43 {strides = array<i32>} : memref<8x128xf32, #tpu.memory_space<vmem>>, vector<8x128xf32>,
      %c0_23 = arith.constant 0 : index
      %c0_24 = arith.constant 0 : index
      %45 = vector.load %arg7[%c0_23, %c0_24] : memref<8x128xf32, #tpu.memory_space<vmem>>, vector<8x128xf32>
      %46 = vector.shape_cast %15 : vector<8x128xf32> to vector<1x8x128xf32>
      %cst_25 = arith.constant dense<0.000000e+00> : vector<8x128xf32>
      %47 = vector.multi_reduction <add>, %46, %cst_25 [0] : vector<1x8x128xf32> to vector<8x128xf32>
      %48 = arith.addf %45, %47 : vector<8x128xf32>
      %c0_26 = arith.constant 0 : index
      %c0_27 = arith.constant 0 : index
      %49 = vector.load %arg7[%c0_26, %c0_27] : memref<8x128xf32, #tpu.memory_space<vmem>>, vector<8x128xf32>
      tpu.vector_store %arg7[%c0_26, %c0_27], %48 {strides = array<i32>} : memref<8x128xf32, #tpu.memory_space<vmem>>, vector<8x128xf32>,
      %c0_28 = arith.constant 0 : index
      %c0_29 = arith.constant 0 : index
      %50 = vector.load %arg8[%c0_28, %c0_29] : memref<8x128xf32, #tpu.memory_space<vmem>>, vector<8x128xf32>
      %51 = vector.shape_cast %33 : vector<8x128xf32> to vector<1x8x128xf32>
      %cst_30 = arith.constant dense<0.000000e+00> : vector<8x128xf32>
      %52 = vector.multi_reduction <add>, %51, %cst_30 [0] : vector<1x8x128xf32> to vector<8x128xf32>
      %53 = arith.addf %50, %52 : vector<8x128xf32>
      %c0_31 = arith.constant 0 : index
      %c0_32 = arith.constant 0 : index
      %54 = vector.load %arg8[%c0_31, %c0_32] : memref<8x128xf32, #tpu.memory_space<vmem>>, vector<8x128xf32>
      tpu.vector_store %arg8[%c0_31, %c0_32], %53 {strides = array<i32>} : memref<8x128xf32, #tpu.memory_space<vmem>>, vector<8x128xf32>,
    } else {
    }
    %true = arith.constant true
    %8 = arith.xori %5, %true : i1
    %9 = arith.extui %8 : i1 to i32
    %c0_i32_3 = arith.constant 0 : i32
    %10 = arith.cmpi ne, %9, %c0_i32_3 : i32
    scf.if %10 {
      %c0 = arith.constant 0 : index
      %c0_6 = arith.constant 0 : index
      %14 = vector.load %arg2[%c0, %c0_6] : memref<8x128xf32, #tpu.memory_space<vmem>>, vector<8x128xf32>
      %c0_7 = arith.constant 0 : index
      %c0_8 = arith.constant 0 : index
      %15 = vector.load %arg3[%c0_7, %c0_8] : memref<8x128xf32, #tpu.memory_space<vmem>>, vector<8x128xf32>
      %c0_i32_9 = arith.constant 0 : i32
      %16 = arith.minsi %1, %c0_i32_9 : i32
      %c1024_i32 = arith.constant 1024 : i32
      %17 = arith.muli %16, %c1024_i32 : i32
      %c512_i32 = arith.constant 512 : i32
      %18 = arith.subi %c512_i32, %17 : i32
      %19 = tpu.iota {dimensions = array<i32: 0>} : vector<8x128xi32>
      %20 = tpu.iota {dimensions = array<i32: 1>} : vector<8x128xi32>
      %c128_i32 = arith.constant 128 : i32
      %21 = vector.broadcast %c128_i32 : i32 to vector<8x128xi32>
      %22 = arith.muli %19, %21 : vector<8x128xi32>
      %23 = arith.addi %22, %20 : vector<8x128xi32>
      %24 = vector.broadcast %18 : i32 to vector<8x128xi32>
      %25 = arith.cmpi slt, %23, %24 : vector<8x128xi32>
      %c1_i32_10 = arith.constant 1 : i32
      %26 = arith.cmpi slt, %1, %c1_i32_10 : i32
      %27 = vector.broadcast %26 : i1 to vector<8x128xi1>
      %28 = arith.andi %25, %27 : vector<8x128xi1>
      %29 = arith.extui %28 : vector<8x128xi1> to vector<8x128xi32>
      %30 = arith.sitofp %29 : vector<8x128xi32> to vector<8x128xf32>
      %cst = arith.constant 0.000000e+00 : f32
      %31 = vector.broadcast %cst : f32 to vector<8x128xf32>
      %32 = arith.select %28, %14, %31 : vector<8x128xi1>, vector<8x128xf32>
      %cst_11 = arith.constant 0.000000e+00 : f32
      %33 = vector.broadcast %cst_11 : f32 to vector<8x128xf32>
      %34 = arith.select %28, %15, %33 : vector<8x128xi1>, vector<8x128xf32>
      %35 = math.absf %32 : vector<8x128xf32>
      %cst_12 = arith.constant 0.000000e+00 : f32
      %36 = vector.broadcast %cst_12 : f32 to vector<8x128xf32>
      %37 = arith.subf %36, %35 : vector<8x128xf32>
      %38 = math.exp %37 : vector<8x128xf32>
      %cst_13 = arith.constant 1.000000e+00 : f32
      %39 = vector.broadcast %cst_13 : f32 to vector<8x128xf32>
      %40 = arith.addf %39, %38 : vector<8x128xf32>
      %41 = tpu.reciprocal %40 : vector<8x128xf32> -> vector<8x128xf32>
      %cst_14 = arith.constant 0.000000e+00 : f32
      %42 = vector.broadcast %cst_14 : f32 to vector<8x128xf32>
      %43 = arith.cmpf oge, %32, %42 : vector<8x128xf32>
      %cst_15 = arith.constant 1.000000e+00 : f32
      %44 = vector.broadcast %cst_15 : f32 to vector<8x128xf32>
      %45 = arith.select %43, %44, %38 : vector<8x128xi1>, vector<8x128xf32>
      %46 = arith.mulf %45, %41 : vector<8x128xf32>
      %cst_16 = arith.constant 0.000000e+00 : f32
      %47 = vector.broadcast %cst_16 : f32 to vector<8x128xf32>
      %48 = arith.maximumf %32, %47 : vector<8x128xf32>
      %49 = arith.mulf %32, %34 : vector<8x128xf32>
      %50 = arith.subf %48, %49 : vector<8x128xf32>
      %51 = math.log1p %38 : vector<8x128xf32>
      %52 = arith.addf %50, %51 : vector<8x128xf32>
      %53 = arith.mulf %46, %30 : vector<8x128xf32>
      %54 = arith.mulf %52, %30 : vector<8x128xf32>
      %c0_17 = arith.constant 0 : index
      %c0_18 = arith.constant 0 : index
      %55 = vector.load %arg5[%c0_17, %c0_18] : memref<8x128xf32, #tpu.memory_space<vmem>>, vector<8x128xf32>
      %56 = arith.mulf %53, %34 : vector<8x128xf32>
      %57 = vector.shape_cast %56 : vector<8x128xf32> to vector<1x8x128xf32>
      %cst_19 = arith.constant dense<0.000000e+00> : vector<8x128xf32>
      %58 = vector.multi_reduction <add>, %57, %cst_19 [0] : vector<1x8x128xf32> to vector<8x128xf32>
      %59 = arith.addf %55, %58 : vector<8x128xf32>
      %c0_20 = arith.constant 0 : index
      %c0_21 = arith.constant 0 : index
      %60 = vector.load %arg5[%c0_20, %c0_21] : memref<8x128xf32, #tpu.memory_space<vmem>>, vector<8x128xf32>
      tpu.vector_store %arg5[%c0_20, %c0_21], %59 {strides = array<i32>} : memref<8x128xf32, #tpu.memory_space<vmem>>, vector<8x128xf32>,
      %c0_22 = arith.constant 0 : index
      %c0_23 = arith.constant 0 : index
      %61 = vector.load %arg6[%c0_22, %c0_23] : memref<8x128xf32, #tpu.memory_space<vmem>>, vector<8x128xf32>
      %62 = vector.shape_cast %53 : vector<8x128xf32> to vector<1x8x128xf32>
      %cst_24 = arith.constant dense<0.000000e+00> : vector<8x128xf32>
      %63 = vector.multi_reduction <add>, %62, %cst_24 [0] : vector<1x8x128xf32> to vector<8x128xf32>
      %64 = arith.addf %61, %63 : vector<8x128xf32>
      %c0_25 = arith.constant 0 : index
      %c0_26 = arith.constant 0 : index
      %65 = vector.load %arg6[%c0_25, %c0_26] : memref<8x128xf32, #tpu.memory_space<vmem>>, vector<8x128xf32>
      tpu.vector_store %arg6[%c0_25, %c0_26], %64 {strides = array<i32>} : memref<8x128xf32, #tpu.memory_space<vmem>>, vector<8x128xf32>,
      %c0_27 = arith.constant 0 : index
      %c0_28 = arith.constant 0 : index
      %66 = vector.load %arg7[%c0_27, %c0_28] : memref<8x128xf32, #tpu.memory_space<vmem>>, vector<8x128xf32>
      %67 = vector.shape_cast %34 : vector<8x128xf32> to vector<1x8x128xf32>
      %cst_29 = arith.constant dense<0.000000e+00> : vector<8x128xf32>
      %68 = vector.multi_reduction <add>, %67, %cst_29 [0] : vector<1x8x128xf32> to vector<8x128xf32>
      %69 = arith.addf %66, %68 : vector<8x128xf32>
      %c0_30 = arith.constant 0 : index
      %c0_31 = arith.constant 0 : index
      %70 = vector.load %arg7[%c0_30, %c0_31] : memref<8x128xf32, #tpu.memory_space<vmem>>, vector<8x128xf32>
      tpu.vector_store %arg7[%c0_30, %c0_31], %69 {strides = array<i32>} : memref<8x128xf32, #tpu.memory_space<vmem>>, vector<8x128xf32>,
      %c0_32 = arith.constant 0 : index
      %c0_33 = arith.constant 0 : index
      %71 = vector.load %arg8[%c0_32, %c0_33] : memref<8x128xf32, #tpu.memory_space<vmem>>, vector<8x128xf32>
      %72 = vector.shape_cast %54 : vector<8x128xf32> to vector<1x8x128xf32>
      %cst_34 = arith.constant dense<0.000000e+00> : vector<8x128xf32>
      %73 = vector.multi_reduction <add>, %72, %cst_34 [0] : vector<1x8x128xf32> to vector<8x128xf32>
      %74 = arith.addf %71, %73 : vector<8x128xf32>
      %c0_35 = arith.constant 0 : index
      %c0_36 = arith.constant 0 : index
      %75 = vector.load %arg8[%c0_35, %c0_36] : memref<8x128xf32, #tpu.memory_space<vmem>>, vector<8x128xf32>
      tpu.vector_store %arg8[%c0_35, %c0_36], %74 {strides = array<i32>} : memref<8x128xf32, #tpu.memory_space<vmem>>, vector<8x128xf32>,
    } else {
    }
    %c0_i32_4 = arith.constant 0 : i32
    %11 = arith.cmpi eq, %arg1, %c0_i32_4 : i32
    %12 = arith.extui %11 : i1 to i32
    %c0_i32_5 = arith.constant 0 : i32
    %13 = arith.cmpi ne, %12, %c0_i32_5 : i32
    scf.if %13 {
      %c0 = arith.constant 0 : index
      %c0_6 = arith.constant 0 : index
      %14 = vector.load %arg5[%c0, %c0_6] : memref<8x128xf32, #tpu.memory_space<vmem>>, vector<8x128xf32>
      %c0_7 = arith.constant 0 : index
      %c0_8 = arith.constant 0 : index
      %c0_9 = arith.constant 0 : index
      %15 = vector.load %arg4[%c0_7, %c0_8, %c0_9] : memref<1x32x128xf32, #tpu.memory_space<vmem>>, vector<1x8x128xf32>
      %16 = vector.shape_cast %15 : vector<1x8x128xf32> to vector<8x128xf32>
      %17 = vector.shape_cast %14 : vector<8x128xf32> to vector<1x8x128xf32>
      tpu.vector_store %arg4[%c0_7, %c0_8, %c0_9], %17 {strides = array<i32>} : memref<1x32x128xf32, #tpu.memory_space<vmem>>, vector<1x8x128xf32>,
      %c0_10 = arith.constant 0 : index
      %c0_11 = arith.constant 0 : index
      %18 = vector.load %arg6[%c0_10, %c0_11] : memref<8x128xf32, #tpu.memory_space<vmem>>, vector<8x128xf32>
      %c0_12 = arith.constant 0 : index
      %c8 = arith.constant 8 : index
      %c0_13 = arith.constant 0 : index
      %19 = vector.load %arg4[%c0_12, %c8, %c0_13] : memref<1x32x128xf32, #tpu.memory_space<vmem>>, vector<1x8x128xf32>
      %20 = vector.shape_cast %19 : vector<1x8x128xf32> to vector<8x128xf32>
      %21 = vector.shape_cast %18 : vector<8x128xf32> to vector<1x8x128xf32>
      tpu.vector_store %arg4[%c0_12, %c8, %c0_13], %21 {strides = array<i32>} : memref<1x32x128xf32, #tpu.memory_space<vmem>>, vector<1x8x128xf32>,
      %c0_14 = arith.constant 0 : index
      %c0_15 = arith.constant 0 : index
      %22 = vector.load %arg7[%c0_14, %c0_15] : memref<8x128xf32, #tpu.memory_space<vmem>>, vector<8x128xf32>
      %c0_16 = arith.constant 0 : index
      %c16 = arith.constant 16 : index
      %c0_17 = arith.constant 0 : index
      %23 = vector.load %arg4[%c0_16, %c16, %c0_17] : memref<1x32x128xf32, #tpu.memory_space<vmem>>, vector<1x8x128xf32>
      %24 = vector.shape_cast %23 : vector<1x8x128xf32> to vector<8x128xf32>
      %25 = vector.shape_cast %22 : vector<8x128xf32> to vector<1x8x128xf32>
      tpu.vector_store %arg4[%c0_16, %c16, %c0_17], %25 {strides = array<i32>} : memref<1x32x128xf32, #tpu.memory_space<vmem>>, vector<1x8x128xf32>,
      %c0_18 = arith.constant 0 : index
      %c0_19 = arith.constant 0 : index
      %26 = vector.load %arg8[%c0_18, %c0_19] : memref<8x128xf32, #tpu.memory_space<vmem>>, vector<8x128xf32>
      %c0_20 = arith.constant 0 : index
      %c24 = arith.constant 24 : index
      %c0_21 = arith.constant 0 : index
      %27 = vector.load %arg4[%c0_20, %c24, %c0_21] : memref<1x32x128xf32, #tpu.memory_space<vmem>>, vector<1x8x128xf32>
      %28 = vector.shape_cast %27 : vector<1x8x128xf32> to vector<8x128xf32>
      %29 = vector.shape_cast %26 : vector<8x128xf32> to vector<1x8x128xf32>
      tpu.vector_store %arg4[%c0_20, %c24, %c0_21], %29 {strides = array<i32>} : memref<1x32x128xf32, #tpu.memory_space<vmem>>, vector<1x8x128xf32>,
    } else {
    }
    return
  }
  func.func @transform_0(%arg0: i32, %arg1: i32) -> (i32, i32) {
    %c1_i32 = arith.constant 1 : i32
    %0 = arith.muli %arg0, %c1_i32 : i32
    %1 = arith.addi %0, %arg1 : i32
    %c0_i32 = arith.constant 0 : i32
    %2 = arith.minsi %1, %c0_i32 : i32
    %c0_i32_0 = arith.constant 0 : i32
    %c0_i32_1 = arith.constant 0 : i32
    return %2, %c0_i32_0 : i32, i32
  }
  func.func @transform_1(%arg0: i32, %arg1: i32) -> (i32, i32) {
    %c1_i32 = arith.constant 1 : i32
    %0 = arith.muli %arg0, %c1_i32 : i32
    %1 = arith.addi %0, %arg1 : i32
    %c0_i32 = arith.constant 0 : i32
    %2 = arith.minsi %1, %c0_i32 : i32
    %c0_i32_0 = arith.constant 0 : i32
    %c0_i32_1 = arith.constant 0 : i32
    return %2, %c0_i32_0 : i32, i32
  }
  func.func @transform_2(%arg0: i32, %arg1: i32) -> (i32, i32, i32) {
    %c0_i32 = arith.constant 0 : i32
    %c0_i32_0 = arith.constant 0 : i32
    %c0_i32_1 = arith.constant 0 : i32
    return %arg0, %c0_i32, %c0_i32_0 : i32, i32, i32
  }
}

</mosaic_0001>

<llo_original>
// kernel: tpu_custom_call.1
$region0: #{tpu_custom_call.1}
  #allocation0 [shape = 'u32[]', space=smem, size = 0x4, offset = 0x4, fixed_abs, tag = 'smem constant byte address 0x4 - core index']
  #allocation1 [shape = 'u32[72,128]{1,0:T(1,128)}', space=vmem, size = 0x9000, scoped, tag = 'internal scratch']
  #allocation2 [shape = 'f32[8,128]{1,0:T(8,128)}', space=vmem, size = 0x1000, scoped, tag = 'scratch operand']
  #allocation3 [shape = 'f32[8,128]{1,0:T(8,128)}', space=vmem, size = 0x1000, scoped, tag = 'scratch operand']
  #allocation4 [shape = 'f32[8,128]{1,0:T(8,128)}', space=vmem, size = 0x1000, scoped, tag = 'scratch operand']
  #allocation5 [shape = 'f32[8,128]{1,0:T(8,128)}', space=vmem, size = 0x1000, scoped, tag = 'scratch operand']
  %s0 = inlined_call_operand.hbm [shape: f32[8,128], index: 0, kind: input, shape index: {}]
  %s1 = inlined_call_operand.hbm [shape: f32[8,128], index: 1, kind: input, shape index: {}]
  %s2 = inlined_call_operand.hbm [shape: f32[1,32,128], index: 2, kind: output, shape index: {}]
  %s3 = sld [smem:[#allocation0]]
  $region42: #{tpu_custom_call.1} parent=0
    _
  %s5 = ssub.s32 1, %s3
  %s6 = scalar_select 0, %s5, %s3
  $region1: #{tpu_custom_call.1} parent=0
    #allocation6 [shape = 'u8[4096]{0}', space=vmem, size = 0x1000, scoped, tag = 'input window, operand 0, single buffered']
    #allocation7 [shape = 's32[1]{0}', space=sflag, size = 0x4, scoped, tag = 'scoped memory for tpu_custom_call.1']
    #allocation8 [shape = 's32[1]{0}', space=sflag, size = 0x4, scoped, tag = 'scoped memory for tpu_custom_call.1']
    #allocation9 [shape = 'u8[4096]{0}', space=vmem, size = 0x1000, scoped, tag = 'input window, operand 1, single buffered']
    #allocation10 [shape = 's32[1]{0}', space=sflag, size = 0x4, scoped, tag = 'scoped memory for tpu_custom_call.1']
    #allocation11 [shape = 'u8[16384]{0}', space=vmem, size = 0x4000, scoped, tag = 'output window, operand 0, single buffered']
    %7 = vsyncpa [#allocation7], 0
    %8 = vsyncpa [#allocation10], 0
    %9 = vsyncpa [#allocation8], 0
    // Predicated region
    $region2: #{tpu_custom_call.1} parent=1 // pred_check
      _
    $region3: #{tpu_custom_call.1} parent=1 // pred_check_branch
      %11 = sbr.rel (0) target = $region5
    $region4: #{tpu_custom_call.1} parent=1 // pred_region
      %s12 = sadd.s32 0, 0
      %p13 = scmp.lt.s32.totalorder %s12, 0
      %s14 = scalar_select %p13, %s12, 0
      %16 = vsyncadd [#allocation7], 0
      %s17 = smul.addr %s14, 8
      %s18 = scalar_lea.hbm %s0, %s17
      %s20 = sshll.u32 %s18, 4
      %s21 = int_to_ptr.hbm [resolvable:$true] %s20
      %s22 = sshll.u32 [#allocation6], 4
      %s23 = int_to_ptr.vmem [resolvable:$true] %s22
      %25 = dma.hbm_to_vmem [thread:$0]  %s21, 128, %s23, [#allocation7]
    $region5: #{tpu_custom_call.1} parent=1 // pred_fallthru
      _
    // Predicated region
    $region6: #{tpu_custom_call.1} parent=1 // pred_check
      _
    $region7: #{tpu_custom_call.1} parent=1 // pred_check_branch
      %27 = sbr.rel (0) target = $region9
    $region8: #{tpu_custom_call.1} parent=1 // pred_region
      %s28 = sadd.s32 0, 0
      %p29 = scmp.lt.s32.totalorder %s28, 0
      %s30 = scalar_select %p29, %s28, 0
      %32 = vsyncadd [#allocation10], 0
      %s33 = smul.addr %s30, 8
      %s34 = scalar_lea.hbm %s1, %s33
      %s36 = sshll.u32 %s34, 4
      %s37 = int_to_ptr.hbm [resolvable:$true] %s36
      %s38 = sshll.u32 [#allocation9], 4
      %s39 = int_to_ptr.vmem [resolvable:$true] %s38
      %41 = dma.hbm_to_vmem [thread:$0]  %s37, 128, %s39, [#allocation10]
    $region9: #{tpu_custom_call.1} parent=1 // pred_fallthru
      _
    // Predicated region
    $region10: #{tpu_custom_call.1} parent=1 // pred_check
      _
    $region11: #{tpu_custom_call.1} parent=1 // pred_check_branch
      %43 = sbr.rel (0) target = $region13
    $region12: #{tpu_custom_call.1} parent=1 // pred_region
      %45 = dma.done [#allocation7], 128
    $region13: #{tpu_custom_call.1} parent=1 // pred_fallthru
      _
    // Predicated region
    $region14: #{tpu_custom_call.1} parent=1 // pred_check
      _
    $region15: #{tpu_custom_call.1} parent=1 // pred_check_branch
      %47 = sbr.rel (0) target = $region17
    $region16: #{tpu_custom_call.1} parent=1 // pred_region
      %49 = dma.done [#allocation10], 128
    $region17: #{tpu_custom_call.1} parent=1 // pred_fallthru
      _
    %s50 = sadd.s32 0, 0
    %p51 = scmp.lt.s32.totalorder %s50, 0
    %s52 = scalar_select %p51, %s50, 0
    %s53 = sadd.s32 0, 0
    %p54 = scmp.lt.s32.totalorder %s53, 0
    %s55 = scalar_select %p54, %s53, 0
    %s56 = sadd.s32 0, 0
    %p57 = scmp.eq.s32.totalorder 0, 0
    // Predicated region
    $region18: #{tpu_custom_call.1} parent=1 // pred_check
      %p58 = pneg %p57
    $region19: #{tpu_custom_call.1} parent=1 // pred_check_branch
      %60 = sbr.rel (%p58) target = $region21
    $region20: #{tpu_custom_call.1} parent=1 // pred_region
      %61 = vst [vmem:[#allocation2] sm:$0xff] 0.0
      %62 = vst [vmem:[#allocation3] sm:$0xff] 0.0
      %63 = vst [vmem:[#allocation4] sm:$0xff] 0.0
      %64 = vst [vmem:[#allocation5] sm:$0xff] 0.0
    $region21: #{tpu_custom_call.1} parent=1 // pred_fallthru
      _
    %p65 = scmp.lt.s32.totalorder %s56, 0
    // Predicated region
    $region22: #{tpu_custom_call.1} parent=1 // pred_check
      %p66 = pneg %p65
    $region23: #{tpu_custom_call.1} parent=1 // pred_check_branch
      %68 = sbr.rel (%p66) target = $region25
    $region24: #{tpu_custom_call.1} parent=1 // pred_region
      %v69 = vld [vmem:[#allocation6] sm:$0xff]
      %v70 = vld [vmem:[#allocation9] sm:$0xff]
      %v71 = vand.u32 2147483647, %v69
      %v72 = vsub.f32 0.0, %v71
      %v73 = vmul.f32 %v72, 1.442695
      %v74 = vpow.pop %v73
      %v75 = vadd.f32 %v74, 1.0
      %v76 = vrcp.pop %v75
      %v77 = vmul.f32 %v75, %v76
      %v78 = vsub.f32 1.0, %v77
      %v79 = vmul.f32 %v76, %v78
      %v80 = vadd.f32 %v76, %v79
      %vm81 = vweird.f32 %v75
      %vm82 = vweird.f32 %v76
      %vm83 = vmor %vm81, %vm82
      %v84 = vsel %vm83, %v76, %v80
      %v85 = vand.u32 2147483647, %v75
      %vm86 = vcmp.eq.f32.partialorder %v85, 8.507059e+37
      %v87 = vand.u32 %v75, 2147483648
      %v88 = vor.u32 1.1754944e-38, %v87
      %v89 = vsel %vm86, %v88, %v84
      %vm90 = vcmp.ge.f32.partialorder %v69, 0.0
      %v91 = vsel %vm90, 1.0, %v74
      %v92 = vmul.f32 %v91, %v89
      %v93 = vmax.f32 %v69, 0.0
      %v94 = vmul.f32 %v69, %v70
      %v95 = vsub.f32 %v93, %v94
      %v96 = vadd.f32 %v74, 1.0
      %v97 = vlog2.pop %v96
      %v98 = vmul.f32 %v97, 0.6931472
      %v99 = vmul.f32 -0.5, %v74
      %v100 = vadd.f32 %v99, 1.0
      %v101 = vmul.f32 %v100, %v74
      %v102 = vand.u32 2147483647, %v74
      %vm103 = vcmp.lt.f32.partialorder %v102, 0.0004427343
      %v104 = vsel %vm103, %v101, %v98
      %v105 = vadd.f32 %v95, %v104
      %v106 = vld [vmem:[#allocation2] sm:$0xff]
      %v107 = vmul.f32 %v92, %v70
      %v108 = vadd.f32 %v107, 0.0
      %v109 = vadd.f32 %v106, %v108
      %110 = vst [vmem:[#allocation2] sm:$0xff] %v109
      %v111 = vld [vmem:[#allocation3] sm:$0xff]
      %v112 = vadd.f32 %v92, 0.0
      %v113 = vadd.f32 %v111, %v112
      %114 = vst [vmem:[#allocation3] sm:$0xff] %v113
      %v115 = vld [vmem:[#allocation4] sm:$0xff]
      %v116 = vadd.f32 %v70, 0.0
      %v117 = vadd.f32 %v115, %v116
      %118 = vst [vmem:[#allocation4] sm:$0xff] %v117
      %v119 = vld [vmem:[#allocation5] sm:$0xff]
      %v120 = vadd.f32 %v105, 0.0
      %v121 = vadd.f32 %v119, %v120
      %122 = vst [vmem:[#allocation5] sm:$0xff] %v121
    $region25: #{tpu_custom_call.1} parent=1 // pred_fallthru
      _
    %p123 = scmp.ge.s32.totalorder %s56, 0
    // Predicated region
    $region26: #{tpu_custom_call.1} parent=1 // pred_check
      %p124 = pneg %p123
    $region27: #{tpu_custom_call.1} parent=1 // pred_check_branch
      %126 = sbr.rel (%p124) target = $region29
    $region28: #{tpu_custom_call.1} parent=1 // pred_region
      %v127 = vld [vmem:[#allocation6] sm:$0xff]
      %v128 = vld [vmem:[#allocation9] sm:$0xff]
      %p129 = scmp.lt.s32.totalorder %s56, 0
      %s130 = scalar_select %p129, %s56, 0
      %s131 = smul.u32 %s130, 1024
      %s132 = ssub.s32 512, %s131
      %v133 = vlaneseq
      %v134 = vshrl.u32 %v133, 7
      %v135 = vlaneseq
      %v136 = vand.u32 %v135, 127
      %v137 = vmul.u32 %v134, 128
      %v138 = vadd.s32 %v137, %v136
      %v139 = vstv %s132
      %vm140 = vcmp.lt.s32.totalorder %v138, %v139
      %p141 = scmp.lt.s32.totalorder %s56, 1
      %s142 = scalar_select %p141, 1, 0
      %v143 = vstv %s142
      %vm144 = vcmp.eq.s32.totalorder %v143, 1
      %vm145 = vmand %vm140, %vm144
      %v146 = vsel %vm145, 1, 0
      %v147 = vcvt.s32.f32 %v146
      %v148 = vsel %vm145, %v127, 0.0
      %v149 = vsel %vm145, %v128, 0.0
      %v150 = vand.u32 2147483647, %v148
      %v151 = vsub.f32 0.0, %v150
      %v152 = vmul.f32 %v151, 1.442695
      %v153 = vpow.pop %v152
      %v154 = vadd.f32 %v153, 1.0
      %v155 = vrcp.pop %v154
      %v156 = vmul.f32 %v154, %v155
      %v157 = vsub.f32 1.0, %v156
      %v158 = vmul.f32 %v155, %v157
      %v159 = vadd.f32 %v155, %v158
      %vm160 = vweird.f32 %v154
      %vm161 = vweird.f32 %v155
      %vm162 = vmor %vm160, %vm161
      %v163 = vsel %vm162, %v155, %v159
      %v164 = vand.u32 2147483647, %v154
      %vm165 = vcmp.eq.f32.partialorder %v164, 8.507059e+37
      %v166 = vand.u32 %v154, 2147483648
      %v167 = vor.u32 1.1754944e-38, %v166
      %v168 = vsel %vm165, %v167, %v163
      %vm169 = vcmp.ge.f32.partialorder %v148, 0.0
      %v170 = vsel %vm169, 1.0, %v153
      %v171 = vmul.f32 %v170, %v168
      %v172 = vmax.f32 %v148, 0.0
      %v173 = vmul.f32 %v148, %v149
      %v174 = vsub.f32 %v172, %v173
      %v175 = vadd.f32 %v153, 1.0
      %v176 = vlog2.pop %v175
      %v177 = vmul.f32 %v176, 0.6931472
      %v178 = vmul.f32 -0.5, %v153
      %v179 = vadd.f32 %v178, 1.0
      %v180 = vmul.f32 %v179, %v153
      %v181 = vand.u32 2147483647, %v153
      %vm182 = vcmp.lt.f32.partialorder %v181, 0.0004427343
      %v183 = vsel %vm182, %v180, %v177
      %v184 = vadd.f32 %v174, %v183
      %v185 = vmul.f32 %v171, %v147
      %v186 = vmul.f32 %v184, %v147
      %v187 = vld [vmem:[#allocation2] sm:$0xff]
      %v188 = vmul.f32 %v185, %v149
      %v189 = vadd.f32 %v188, 0.0
      %v190 = vadd.f32 %v187, %v189
      %191 = vst [vmem:[#allocation2] sm:$0xff] %v190
      %v192 = vld [vmem:[#allocation3] sm:$0xff]
      %v193 = vadd.f32 %v185, 0.0
      %v194 = vadd.f32 %v192, %v193
      %195 = vst [vmem:[#allocation3] sm:$0xff] %v194
      %v196 = vld [vmem:[#allocation4] sm:$0xff]
      %v197 = vadd.f32 %v149, 0.0
      %v198 = vadd.f32 %v196, %v197
      %199 = vst [vmem:[#allocation4] sm:$0xff] %v198
      %v200 = vld [vmem:[#allocation5] sm:$0xff]
      %v201 = vadd.f32 %v186, 0.0
      %v202 = vadd.f32 %v200, %v201
      %203 = vst [vmem:[#allocation5] sm:$0xff] %v202
    $region29: #{tpu_custom_call.1} parent=1 // pred_fallthru
      _
    // Predicated region
    $region30: #{tpu_custom_call.1} parent=1 // pred_check
      %p204 = pneg %p57
    $region31: #{tpu_custom_call.1} parent=1 // pred_check_branch
      %206 = sbr.rel (%p204) target = $region33
    $region32: #{tpu_custom_call.1} parent=1 // pred_region
      %v207 = vld [vmem:[#allocation2] sm:$0xff]
      %208 = vst [vmem:[#allocation11] sm:$0xff] %v207
      %v209 = vld [vmem:[#allocation3] sm:$0xff]
      %210 = vst [vmem:[#allocation11 + $0x8] sm:$0xff] %v209
      %v211 = vld [vmem:[#allocation4] sm:$0xff]
      %212 = vst [vmem:[#allocation11 + $0x10] sm:$0xff] %v211
      %v213 = vld [vmem:[#allocation5] sm:$0xff]
      %214 = vst [vmem:[#allocation11 + $0x18] sm:$0xff] %v213
    $region33: #{tpu_custom_call.1} parent=1 // pred_fallthru
      _
    // Predicated region
    $region34: #{tpu_custom_call.1} parent=1 // pred_check
      _
    $region35: #{tpu_custom_call.1} parent=1 // pred_check_branch
      %216 = sbr.rel (0) target = $region37
    $region36: #{tpu_custom_call.1} parent=1 // pred_region
      %218 = vsyncadd [#allocation8], 0
      %s219 = sshll.u32 [#allocation11], 4
      %s220 = int_to_ptr.vmem [resolvable:$true] %s219
      %s221 = sshll.u32 %s2, 4
      %s222 = int_to_ptr.hbm [resolvable:$true] %s221
      %227 = dma.vmem_to_hbm [thread:$0]  %s220, 512, %s222, [#allocation8], 128, 128, 8
    $region37: #{tpu_custom_call.1} parent=1 // pred_fallthru
      _
    // Predicated region
    $region38: #{tpu_custom_call.1} parent=1 // pred_check
      _
    $region39: #{tpu_custom_call.1} parent=1 // pred_check_branch
      %229 = sbr.rel (0) target = $region41
    $region40: #{tpu_custom_call.1} parent=1 // pred_region
      %231 = dma.done [#allocation8], 512
    $region41: #{tpu_custom_call.1} parent=1 // pred_fallthru
      _
    %232 = vsyncpa [#allocation7], 1
    %233 = vsyncpa [#allocation10], 1
    %234 = vsyncpa [#allocation8], 1

</llo_original>
